<compile_context>
chip_gen: v7x
topology: tpu7x:2x2x1
jax: 0.10.0
libtpu: 0.0.40
codegen_flags: <defaults>
</compile_context>

<pallas_src>
import functools

import jax
import jax.numpy as jnp
from jax.experimental import pallas as pl
from jax.experimental.pallas import tpu as pltpu

_H1_PAD = 512   # 400 -> 512 (lane multiple, also 256-aligned)


def _round_up(x, m):
    return (x + m - 1) // m * m


def _h2_pad_for_device():
    """Pick the padded middle hidden dim (300 -> ?) per TPU generation."""
    try:
        kind = jax.devices()[0].device_kind.lower()
    except Exception:  # pragma: no cover - defensive only
        kind = ""
    # 128-wide MXU generations (v5e and older): 384 = 3 clean 128-wide passes;
    # padding to 512 would add ~33% MXU work on the dominant matmuls.
    if ("v5" in kind) or ("v4" in kind) or ("v3" in kind) or ("v2" in kind):
        return 384
    # v6e / v7x: 2x256^2 MXU -> 512 aligns layer-2 N and layer-3 K to 256.
    return 512


def _choose_batch_tile(batch):
    """Batch tile: big enough to amortize ~0.35us per-grid-step overhead,
    small enough to keep padding waste low and (when batch is large) leave
    >= 2 grid steps so the 'parallel' axis shards across both v7x cores."""
    b_al = _round_up(max(batch, 1), 16)   # 16: bf16 sublane packing of output
    if b_al <= 256:
        return b_al                       # tiny batch: one grid step, no waste
    best_tb, best_waste = 128, None
    for tb in (1024, 512, 256, 128):
        padded = _round_up(b_al, tb)
        if padded // tb < 2:              # keep grid >= 2 (v7x megacore)
            continue
        waste = padded - batch
        if best_waste is None or waste < best_waste:
            best_tb, best_waste = tb, waste
        if waste * 8 <= batch:            # <= 12.5% wasted rows: good enough
            return tb
    return best_tb


def _actor_kernel(x_ref, w1_ref, b1_ref, w2_ref, b2_ref, w3_ref, b3_ref,
                  out_ref, *, max_action):
    # Layer 1: Linear(state -> H1_PAD) + ReLU. bf16 MXU operands, f32 acc.
    x_bf16 = x_ref[...].astype(jnp.bfloat16)          # in-kernel cast (VPU)
    h1 = jnp.dot(x_bf16, w1_ref[...], preferred_element_type=jnp.float32)
    h1 = jnp.maximum(h1 + b1_ref[...], 0.0)           # f32 elementwise

    # Layer 2: Linear(H1_PAD -> H2_PAD) + ReLU
    h2 = jnp.dot(h1.astype(jnp.bfloat16), w2_ref[...],
                 preferred_element_type=jnp.float32)
    h2 = jnp.maximum(h2 + b2_ref[...], 0.0)

    # Layer 3: Linear(H2_PAD -> A_PAD) + tanh, scaled by max_action.
    h3 = jnp.dot(h2.astype(jnp.bfloat16), w3_ref[...],
                 preferred_element_type=jnp.float32)
    out = jnp.tanh(h3 + b3_ref[...]) * max_action
    out_ref[...] = out.astype(out_ref.dtype)          # bf16 writeback


def actor_forward(x, padded_params, max_action, action_dim):
    """Forward pass of the Actor MLP as a single batch-tiled Pallas call.

    `padded_params` must come from `prepare_actor_params` (lane-padded, bf16
    weights / f32 biases). Returns f32 (batch, action_dim).
    """
    w1, b1, w2, b2, w3, b3 = padded_params
    batch = x.shape[0]
    s_pad = w1.shape[0]
    a_pad = w3.shape[1]

    tb = _choose_batch_tile(batch)
    batch_padded = _round_up(batch, tb)

    # x stays f32; only pad when alignment actually requires it.
    x_p = x
    pad_rows = batch_padded - batch
    pad_cols = s_pad - x.shape[1]
    if pad_rows or pad_cols:
        x_p = jnp.pad(x_p, ((0, pad_rows), (0, pad_cols)))

    kernel = functools.partial(_actor_kernel, max_action=float(max_action))

    const = lambda i: (0, 0)   # weights/biases stay VMEM-resident across steps

    cp_kwargs = dict(dimension_semantics=("parallel",))
    if tb >= 1024:
        # f32 intermediates (h1/h2) grow with tb; raise the scoped VMEM limit
        # above the conservative defaults while staying under v7x's 64 MiB.
        cp_kwargs["vmem_limit_bytes"] = 48 * 1024 * 1024

    out_padded = pl.pallas_call(
        kernel,
        out_shape=jax.ShapeDtypeStruct((batch_padded, a_pad), jnp.bfloat16),
        grid=(batch_padded // tb,),
        in_specs=[
            pl.BlockSpec((tb, s_pad), lambda i: (i, 0)),      # x tile (f32)
            pl.BlockSpec(w1.shape, const),
            pl.BlockSpec(b1.shape, const),
            pl.BlockSpec(w2.shape, const),
            pl.BlockSpec(b2.shape, const),
            pl.BlockSpec(w3.shape, const),
            pl.BlockSpec(b3.shape, const),
        ],
        out_specs=pl.BlockSpec((tb, a_pad), lambda i: (i, 0)),
        compiler_params=pltpu.CompilerParams(**cp_kwargs),
    )(x_p, w1, b1, w2, b2, w3, b3)

    return out_padded[:batch, :action_dim].astype(jnp.float32)


def init_actor_params(key, state_dim, action_dim):
    """Deterministic init mimicking PyTorch nn.Linear defaults:
    U(-1/sqrt(fan_in), 1/sqrt(fan_in)) for both weight and bias.
    Weights stored as (in_features, out_features), all f32 (logical shapes)."""
    dims = [(state_dim, 400), (400, 300), (300, action_dim)]
    params = []
    for (fan_in, fan_out) in dims:
        key, kw, kb = jax.random.split(key, 3)
        bound = 1.0 / jnp.sqrt(float(fan_in))
        w = jax.random.uniform(kw, (fan_in, fan_out), jnp.float32, -bound, bound)
        b = jax.random.uniform(kb, (1, fan_out), jnp.float32, -bound, bound)
        params += [w, b]
    return tuple(params)


def prepare_actor_params(params_f32, state_dim, action_dim):
    """Zero-pad dims to hardware-friendly multiples and cast weights to bf16.

    Hidden dims: 400 -> 512 always; 300 -> 512 (v6e/v7x) or 384 (v5e-class).
    state_dim is padded to a multiple of 8 (f32 sublane), action_dim to 128
    (lane-dense output). Padding rows/cols are zero so the logical output is
    unchanged. Biases stay f32."""
    w1, b1, w2, b2, w3, b3 = params_f32
    s_pad = _round_up(state_dim, 8)
    h2_pad = _h2_pad_for_device()
    a_pad = _round_up(action_dim, 128)

    def pad2(a, rows, cols):
        return jnp.pad(a, ((0, rows - a.shape[0]), (0, cols - a.shape[1])))

    w1p = pad2(w1, s_pad, _H1_PAD).astype(jnp.bfloat16)
    b1p = pad2(b1, 1, _H1_PAD)                      # biases stay f32
    w2p = pad2(w2, _H1_PAD, h2_pad).astype(jnp.bfloat16)
    b2p = pad2(b2, 1, h2_pad)
    w3p = pad2(w3, h2_pad, a_pad).astype(jnp.bfloat16)
    b3p = pad2(b3, 1, a_pad)
    return (w1p, b1p, w2p, b2p, w3p, b3p)


def actor_reference_f32(x, params_f32, max_action):
    w1, b1, w2, b2, w3, b3 = params_f32
    h = jnp.maximum(x @ w1 + b1, 0.0)
    h = jnp.maximum(h @ w2 + b2, 0.0)
    return jnp.tanh(h @ w3 + b3) * max_action


def actor_reference_bf16(x, params_f32, max_action):
    """bf16-matmul-simulated reference (tighter check vs the kernel)."""
    w1, b1, w2, b2, w3, b3 = params_f32

    def mm(a, w):
        return jnp.dot(a.astype(jnp.bfloat16), w.astype(jnp.bfloat16),
                       preferred_element_type=jnp.float32)

    h = jnp.maximum(mm(x, w1) + b1, 0.0)
    h = jnp.maximum(mm(h, w2) + b2, 0.0)
    return jnp.tanh(mm(h, w3) + b3) * max_action


if __name__ == "__main__":
    batch = 4
    state_dim = 16
    action_dim = 8
    max_action = 2.0

    key = jax.random.PRNGKey(0)
    key, kx = jax.random.split(key)
    x = jax.random.normal(kx, (batch, state_dim), dtype=jnp.float32)

    params_f32 = init_actor_params(key, state_dim, action_dim)
    padded_params = prepare_actor_params(params_f32, state_dim, action_dim)

    out = actor_forward(x, padded_params, max_action, action_dim)
    out = jax.block_until_ready(out)
    assert out.shape == (batch, action_dim)
    assert out.dtype == jnp.float32

    # Loose check vs the pure-f32 reference (bf16 weights/activations/output).
    ref_f32 = actor_reference_f32(x, params_f32, max_action)
    assert jnp.allclose(out, ref_f32, atol=6e-2, rtol=6e-2), \
        "mismatch vs f32 JAX reference"

    # Tighter check vs a bf16-matmul-simulated reference (only the bf16 output
    # rounding and accumulation-order differences remain).
    ref_bf16 = actor_reference_bf16(x, params_f32, max_action)
    assert jnp.allclose(out, ref_bf16, atol=2.5e-2, rtol=2.5e-2), \
        "mismatch vs bf16-simulated JAX reference"

    print("KERNEL_OK")
</pallas_src>

<mosaic_0001>
module attributes {stable_mosaic.version = 11 : i64} {
  func.func @_actor_kernel(%arg0: i32, %arg1: memref<16x16xf32, #tpu.memory_space<vmem>>, %arg2: memref<16x512xbf16, #tpu.memory_space<vmem>>, %arg3: memref<1x512xf32, #tpu.memory_space<vmem>>, %arg4: memref<512x512xbf16, #tpu.memory_space<vmem>>, %arg5: memref<1x512xf32, #tpu.memory_space<vmem>>, %arg6: memref<512x128xbf16, #tpu.memory_space<vmem>>, %arg7: memref<1x128xf32, #tpu.memory_space<vmem>>, %arg8: memref<16x128xbf16, #tpu.memory_space<vmem>>) attributes {dimension_semantics = [#tpu.dimension_semantics<parallel>], iteration_bounds = array<i64: 1>, scalar_prefetch = 0 : i64, scratch_operands = 0 : i64, tpu.core_type = #tpu.core_type<tc>, window_params = [{transform_indices = @transform_0, window_bounds = array<i64: 16, 16>}, {pipeline_mode = #tpu.pipeline_mode<synchronous>, transform_indices = @transform_1, window_bounds = array<i64: 16, 512>}, {pipeline_mode = #tpu.pipeline_mode<synchronous>, transform_indices = @transform_2, window_bounds = array<i64: 1, 512>}, {pipeline_mode = #tpu.pipeline_mode<synchronous>, transform_indices = @transform_3, window_bounds = array<i64: 512, 512>}, {pipeline_mode = #tpu.pipeline_mode<synchronous>, transform_indices = @transform_4, window_bounds = array<i64: 1, 512>}, {pipeline_mode = #tpu.pipeline_mode<synchronous>, transform_indices = @transform_5, window_bounds = array<i64: 512, 128>}, {pipeline_mode = #tpu.pipeline_mode<synchronous>, transform_indices = @transform_6, window_bounds = array<i64: 1, 128>}, {transform_indices = @transform_7, window_bounds = array<i64: 16, 128>}]} {
    %c0 = arith.constant 0 : index
    %c0_0 = arith.constant 0 : index
    %0 = vector.load %arg1[%c0, %c0_0] : memref<16x16xf32, #tpu.memory_space<vmem>>, vector<16x16xf32>
    %1 = arith.truncf %0 : vector<16x16xf32> to vector<16x16xbf16>
    %c0_1 = arith.constant 0 : index
    %c0_2 = arith.constant 0 : index
    %2 = vector.load %arg2[%c0_1, %c0_2] : memref<16x512xbf16, #tpu.memory_space<vmem>>, vector<16x512xbf16>
    %cst = arith.constant dense<0.000000e+00> : vector<16x512xf32>
    %3 = tpu.matmul %1, %2, %cst {dimension_numbers = #tpu.dot_dimension_numbers<[1], [0], [0], [1], [0, 0, 1, 1], [], []>} : vector<16x16xbf16>, vector<16x512xbf16>, vector<16x512xf32> -> vector<16x512xf32>
    %c0_3 = arith.constant 0 : index
    %c0_4 = arith.constant 0 : index
    %4 = vector.load %arg3[%c0_3, %c0_4] : memref<1x512xf32, #tpu.memory_space<vmem>>, vector<1x512xf32>
    %5 = vector.broadcast %4 : vector<1x512xf32> to vector<16x512xf32>
    %6 = arith.addf %3, %5 : vector<16x512xf32>
    %cst_5 = arith.constant 0.000000e+00 : f32
    %7 = vector.broadcast %cst_5 : f32 to vector<16x512xf32>
    %8 = arith.maximumf %6, %7 : vector<16x512xf32>
    %9 = arith.truncf %8 : vector<16x512xf32> to vector<16x512xbf16>
    %c0_6 = arith.constant 0 : index
    %c0_7 = arith.constant 0 : index
    %10 = vector.load %arg4[%c0_6, %c0_7] : memref<512x512xbf16, #tpu.memory_space<vmem>>, vector<512x512xbf16>
    %cst_8 = arith.constant dense<0.000000e+00> : vector<16x512xf32>
    %11 = tpu.matmul %9, %10, %cst_8 {dimension_numbers = #tpu.dot_dimension_numbers<[1], [0], [0], [1], [0, 0, 1, 1], [], []>} : vector<16x512xbf16>, vector<512x512xbf16>, vector<16x512xf32> -> vector<16x512xf32>
    %c0_9 = arith.constant 0 : index
    %c0_10 = arith.constant 0 : index
    %12 = vector.load %arg5[%c0_9, %c0_10] : memref<1x512xf32, #tpu.memory_space<vmem>>, vector<1x512xf32>
    %13 = vector.broadcast %12 : vector<1x512xf32> to vector<16x512xf32>
    %14 = arith.addf %11, %13 : vector<16x512xf32>
    %cst_11 = arith.constant 0.000000e+00 : f32
    %15 = vector.broadcast %cst_11 : f32 to vector<16x512xf32>
    %16 = arith.maximumf %14, %15 : vector<16x512xf32>
    %17 = arith.truncf %16 : vector<16x512xf32> to vector<16x512xbf16>
    %c0_12 = arith.constant 0 : index
    %c0_13 = arith.constant 0 : index
    %18 = vector.load %arg6[%c0_12, %c0_13] : memref<512x128xbf16, #tpu.memory_space<vmem>>, vector<512x128xbf16>
    %cst_14 = arith.constant dense<0.000000e+00> : vector<16x128xf32>
    %19 = tpu.matmul %17, %18, %cst_14 {dimension_numbers = #tpu.dot_dimension_numbers<[1], [0], [0], [1], [0, 0, 1, 1], [], []>} : vector<16x512xbf16>, vector<512x128xbf16>, vector<16x128xf32> -> vector<16x128xf32>
    %c0_15 = arith.constant 0 : index
    %c0_16 = arith.constant 0 : index
    %20 = vector.load %arg7[%c0_15, %c0_16] : memref<1x128xf32, #tpu.memory_space<vmem>>, vector<1x128xf32>
    %21 = vector.broadcast %20 : vector<1x128xf32> to vector<16x128xf32>
    %22 = arith.addf %19, %21 : vector<16x128xf32>
    %23 = math.tanh %22 : vector<16x128xf32>
    %cst_17 = arith.constant 2.000000e+00 : f32
    %24 = vector.broadcast %cst_17 : f32 to vector<16x128xf32>
    %25 = arith.mulf %23, %24 : vector<16x128xf32>
    %26 = arith.truncf %25 : vector<16x128xf32> to vector<16x128xbf16>
    %c0_18 = arith.constant 0 : index
    %c0_19 = arith.constant 0 : index
    %27 = vector.load %arg8[%c0_18, %c0_19] : memref<16x128xbf16, #tpu.memory_space<vmem>>, vector<16x128xbf16>
    tpu.vector_store %arg8[%c0_18, %c0_19], %26 {strides = array<i32>} : memref<16x128xbf16, #tpu.memory_space<vmem>>, vector<16x128xbf16>,
    return
  }
  func.func @transform_0(%arg0: i32) -> (i32, i32) {
    %c0_i32 = arith.constant 0 : i32
    %c0_i32_0 = arith.constant 0 : i32
    return %arg0, %c0_i32 : i32, i32
  }
  func.func @transform_1(%arg0: i32) -> (i32, i32) {
    %c0_i32 = arith.constant 0 : i32
    %c0_i32_0 = arith.constant 0 : i32
    %c0_i32_1 = arith.constant 0 : i32
    return %c0_i32, %c0_i32_0 : i32, i32
  }
  func.func @transform_2(%arg0: i32) -> (i32, i32) {
    %c0_i32 = arith.constant 0 : i32
    %c0_i32_0 = arith.constant 0 : i32
    %c0_i32_1 = arith.constant 0 : i32
    return %c0_i32, %c0_i32_0 : i32, i32
  }
  func.func @transform_3(%arg0: i32) -> (i32, i32) {
    %c0_i32 = arith.constant 0 : i32
    %c0_i32_0 = arith.constant 0 : i32
    %c0_i32_1 = arith.constant 0 : i32
    return %c0_i32, %c0_i32_0 : i32, i32
  }
  func.func @transform_4(%arg0: i32) -> (i32, i32) {
    %c0_i32 = arith.constant 0 : i32
    %c0_i32_0 = arith.constant 0 : i32
    %c0_i32_1 = arith.constant 0 : i32
    return %c0_i32, %c0_i32_0 : i32, i32
  }
  func.func @transform_5(%arg0: i32) -> (i32, i32) {
    %c0_i32 = arith.constant 0 : i32
    %c0_i32_0 = arith.constant 0 : i32
    %c0_i32_1 = arith.constant 0 : i32
    return %c0_i32, %c0_i32_0 : i32, i32
  }
  func.func @transform_6(%arg0: i32) -> (i32, i32) {
    %c0_i32 = arith.constant 0 : i32
    %c0_i32_0 = arith.constant 0 : i32
    %c0_i32_1 = arith.constant 0 : i32
    return %c0_i32, %c0_i32_0 : i32, i32
  }
  func.func @transform_7(%arg0: i32) -> (i32, i32) {
    %c0_i32 = arith.constant 0 : i32
    %c0_i32_0 = arith.constant 0 : i32
    return %arg0, %c0_i32 : i32, i32
  }
}

</mosaic_0001>

<llo_original>
// kernel: tpu_custom_call.1
$region0: #{tpu_custom_call.1}
  #allocation0 [shape = 'u32[]', space=smem, size = 0x4, offset = 0x4, fixed_abs, tag = 'smem constant byte address 0x4 - core index']
  #allocation1 [shape = 'u32[144,128]{1,0:T(1,128)}', space=vmem, size = 0x12000, scoped, tag = 'internal scratch']
  %s0 = inlined_call_operand.hbm [shape: f32[16,16], index: 0, kind: input, shape index: {}]
  %s1 = inlined_call_operand.hbm [shape: bf16[16,512], index: 1, kind: input, shape index: {}]
  %s2 = inlined_call_operand.vmem [shape: f32[1,512], index: 2, kind: input, shape index: {}]
  %s3 = inlined_call_operand.hbm [shape: bf16[512,512], index: 3, kind: input, shape index: {}]
  %s4 = inlined_call_operand.vmem [shape: f32[1,512], index: 4, kind: input, shape index: {}]
  %s5 = inlined_call_operand.hbm [shape: bf16[512,128], index: 5, kind: input, shape index: {}]
  %s6 = inlined_call_operand.vmem [shape: f32[1,128], index: 6, kind: input, shape index: {}]
  %s7 = inlined_call_operand.hbm [shape: bf16[16,128], index: 7, kind: output, shape index: {}]
  %s8 = sld [smem:[#allocation0]]
  $region54: #{tpu_custom_call.1} parent=0
    _
  %s10 = ssub.s32 1, %s8
  %s11 = scalar_select 0, %s10, %s8
  $region1: #{tpu_custom_call.1} parent=0
    #allocation2 [shape = 'u8[8192]{0}', space=vmem, size = 0x2000, scoped, tag = 'input window, operand 0, single buffered']
    #allocation3 [shape = 's32[1]{0}', space=sflag, size = 0x4, scoped, tag = 'scoped memory for tpu_custom_call.1']
    #allocation4 [shape = 's32[1]{0}', space=sflag, size = 0x4, scoped, tag = 'scoped memory for tpu_custom_call.1']
    #allocation5 [shape = 'u8[16384]{0}', space=vmem, size = 0x4000, scoped, tag = 'input window, operand 1, single buffered']
    #allocation6 [shape = 's32[1]{0}', space=sflag, size = 0x4, scoped, tag = 'scoped memory for tpu_custom_call.1']
    #allocation7 [shape = 'u8[524288]{0}', space=vmem, size = 0x80000, scoped, tag = 'input window, operand 3, single buffered']
    #allocation8 [shape = 'u8[131072]{0}', space=vmem, size = 0x20000, scoped, tag = 'input window, operand 5, single buffered']
    #allocation9 [shape = 's32[1]{0}', space=sflag, size = 0x4, scoped, tag = 'scoped memory for tpu_custom_call.1']
    #allocation10 [shape = 'u8[4096]{0}', space=vmem, size = 0x1000, scoped, tag = 'output window, operand 0, single buffered']
    %12 = vsyncpa [#allocation3], 0
    %13 = vsyncpa [#allocation6], 0
    %14 = vsyncpa [#allocation9], 0
    %15 = vsyncpa [#allocation4], 0
    // Predicated region
    $region2: #{tpu_custom_call.1} parent=1 // pred_check
      _
    $region3: #{tpu_custom_call.1} parent=1 // pred_check_branch
      %17 = sbr.rel (0) target = $region5
    $region4: #{tpu_custom_call.1} parent=1 // pred_region
      %s19 = ssub.s32 256, 256
      %20 = vsyncadd [#allocation3], %s19
      %s21 = sshll.u32 [#allocation2], 4
      %s22 = int_to_ptr.vmem [resolvable:$true] %s21
      %27 = dma.hbm_to_vmem [thread:$0]  %s0, 256, %s22, [#allocation3], 128, 128, 8
    $region5: #{tpu_custom_call.1} parent=1 // pred_fallthru
      _
    // Predicated region
    $region6: #{tpu_custom_call.1} parent=1 // pred_check
      _
    $region7: #{tpu_custom_call.1} parent=1 // pred_check_branch
      %29 = sbr.rel (0) target = $region9
    $region8: #{tpu_custom_call.1} parent=1 // pred_region
      %s31 = ssub.s32 512, 512
      %32 = vsyncadd [#allocation6], %s31
      %s33 = sshll.u32 [#allocation5], 4
      %s34 = int_to_ptr.vmem [resolvable:$true] %s33
      %39 = dma.hbm_to_vmem [thread:$0]  %s1, 512, %s34, [#allocation6], 256, 256, 16
    $region9: #{tpu_custom_call.1} parent=1 // pred_fallthru
      _
    // Predicated region
    $region10: #{tpu_custom_call.1} parent=1 // pred_check
      _
    $region11: #{tpu_custom_call.1} parent=1 // pred_check_branch
      %41 = sbr.rel (0) target = $region13
    $region12: #{tpu_custom_call.1} parent=1 // pred_region
      _
    $region13: #{tpu_custom_call.1} parent=1 // pred_fallthru
      _
    // Predicated region
    $region14: #{tpu_custom_call.1} parent=1 // pred_check
      _
    $region15: #{tpu_custom_call.1} parent=1 // pred_check_branch
      %43 = sbr.rel (0) target = $region17
    $region16: #{tpu_custom_call.1} parent=1 // pred_region
      %s45 = ssub.s32 16384, 16384
      %46 = vsyncadd [#allocation6], %s45
      %s47 = sshll.u32 [#allocation7], 4
      %s48 = int_to_ptr.vmem [resolvable:$true] %s47
      %53 = dma.hbm_to_vmem [thread:$0]  %s3, 16384, %s48, [#allocation6], 256, 256, 16
    $region17: #{tpu_custom_call.1} parent=1 // pred_fallthru
      _
    // Predicated region
    $region18: #{tpu_custom_call.1} parent=1 // pred_check
      _
    $region19: #{tpu_custom_call.1} parent=1 // pred_check_branch
      %55 = sbr.rel (0) target = $region21
    $region20: #{tpu_custom_call.1} parent=1 // pred_region
      _
    $region21: #{tpu_custom_call.1} parent=1 // pred_fallthru
      _
    // Predicated region
    $region22: #{tpu_custom_call.1} parent=1 // pred_check
      _
    $region23: #{tpu_custom_call.1} parent=1 // pred_check_branch
      %57 = sbr.rel (0) target = $region25
    $region24: #{tpu_custom_call.1} parent=1 // pred_region
      %s59 = ssub.s32 4096, 4096
      %60 = vsyncadd [#allocation9], %s59
      %s61 = sshll.u32 [#allocation8], 4
      %s62 = int_to_ptr.vmem [resolvable:$true] %s61
      %67 = dma.hbm_to_vmem [thread:$0]  %s5, 4096, %s62, [#allocation9], 64, 64, 4
    $region25: #{tpu_custom_call.1} parent=1 // pred_fallthru
      _
    // Predicated region
    $region26: #{tpu_custom_call.1} parent=1 // pred_check
      _
    $region27: #{tpu_custom_call.1} parent=1 // pred_check_branch
      %69 = sbr.rel (0) target = $region29
    $region28: #{tpu_custom_call.1} parent=1 // pred_region
      _
    $region29: #{tpu_custom_call.1} parent=1 // pred_fallthru
      _
    // Predicated region
    $region30: #{tpu_custom_call.1} parent=1 // pred_check
      _
    $region31: #{tpu_custom_call.1} parent=1 // pred_check_branch
      %71 = sbr.rel (0) target = $region33
    $region32: #{tpu_custom_call.1} parent=1 // pred_region
      %72 = dma.done [#allocation3], 256
    $region33: #{tpu_custom_call.1} parent=1 // pred_fallthru
      _
    // Predicated region
    $region34: #{tpu_custom_call.1} parent=1 // pred_check
      _
    $region35: #{tpu_custom_call.1} parent=1 // pred_check_branch
      %74 = sbr.rel (0) target = $region37
    $region36: #{tpu_custom_call.1} parent=1 // pred_region
      %75 = dma.done [#allocation6], 512
    $region37: #{tpu_custom_call.1} parent=1 // pred_fallthru
      _
    // Predicated region
    $region38: #{tpu_custom_call.1} parent=1 // pred_check
      _
    $region39: #{tpu_custom_call.1} parent=1 // pred_check_branch
      %77 = sbr.rel (0) target = $region41
    $region40: #{tpu_custom_call.1} parent=1 // pred_region
      %78 = dma.done [#allocation6], 16384
    $region41: #{tpu_custom_call.1} parent=1 // pred_fallthru
      _
    // Predicated region
    $region42: #{tpu_custom_call.1} parent=1 // pred_check
      _
    $region43: #{tpu_custom_call.1} parent=1 // pred_check_branch
      %80 = sbr.rel (0) target = $region45
    $region44: #{tpu_custom_call.1} parent=1 // pred_region
      %81 = dma.done [#allocation9], 4096
    $region45: #{tpu_custom_call.1} parent=1 // pred_fallthru
      _
    %v83 = vld [vmem:[#allocation2] sm:$0xff]
    %v84 = vld [vmem:[#allocation2 + $0x8] sm:$0xff]
    %v85 = vpack.c.bf16 %v84, %v83
    %v86 = vld [vmem:[#allocation5] sm:$0xff]
    %v87 = vld [vmem:[#allocation5 + $0x8] sm:$0xff]
    %v88 = vld [vmem:[#allocation5 + $0x10] sm:$0xff]
    %v89 = vld [vmem:[#allocation5 + $0x18] sm:$0xff]
    %v90 = vld [vmem:[%s2] sm:$0xf]
    %v92 = vlaneseq
    %v93 = vshrl.u32 %v92, 7
    %v94 = vsub.s32 0, %v93
    %v95 = vrot.slane %v90, %v94
    %v96 = vlaneseq
    %v97 = vshrl.u32 %v96, 7
    %v98 = vsub.s32 1, %v97
    %v99 = vrot.slane %v90, %v98
    %v100 = vlaneseq
    %v101 = vshrl.u32 %v100, 7
    %v102 = vsub.s32 2, %v101
    %v103 = vrot.slane %v90, %v102
    %v104 = vlaneseq
    %v105 = vshrl.u32 %v104, 7
    %v106 = vsub.s32 3, %v105
    %v107 = vrot.slane %v90, %v106
    %v116 = vunpack.c.l.b16 %v86
    %v117 = vunpack.c.h.b16 %v86
    %v118 = vunpack.c.l.b16 %v87
    %v119 = vunpack.c.h.b16 %v87
    %v120 = vunpack.c.l.b16 %v88
    %v121 = vunpack.c.h.b16 %v88
    %v122 = vunpack.c.l.b16 %v89
    %v123 = vunpack.c.h.b16 %v89
    %v124 = vpack.c.b16 %v120, %v116
    %v125 = vpack.c.b16 %v121, %v117
    %v126 = vpack.c.b16 %v122, %v118
    %v127 = vpack.c.b16 %v123, %v119
    %vm132 = vcmask 130048
    %v134 = vsel %vm132, %v85, 0
    %136 = vmatprep.subr.bf16.mxu0 %v125
    %137 = vmatpush1.bf16.msra.mxu0 %v124
    %138 = vmatprep.subr.bf16.mxu0 0
    %139 = vmatpush1.bf16.msra.mxu0 0
    %140 = vmatprep.subr.bf16.mxu0 0
    %141 = vmatpush1.bf16.msra.mxu0 0
    %142 = vmatprep.subr.bf16.mxu0 0
    %143 = vmatpush1.bf16.msra.mxu0 0
    %144 = vmatprep.subr.bf16.mxu0 0
    %145 = vmatpush1.bf16.msra.mxu0 0
    %146 = vmatprep.subr.bf16.mxu0 0
    %147 = vmatpush1.bf16.msra.mxu0 0
    %148 = vmatprep.subr.bf16.mxu0 0
    %149 = vmatpush1.bf16.msra.mxu0 0
    %150 = vmatprep.subr.bf16.mxu0 0
    %151 = vmatpush1.bf16.msra.mxu0 0
    %152 = vmatprep.subr.bf16.mxu0 0
    %153 = vmatpush1.bf16.msra.mxu0 0
    %154 = vmatprep.subr.bf16.mxu0 0
    %155 = vmatpush1.bf16.msra.mxu0 0
    %156 = vmatprep.subr.bf16.mxu0 0
    %157 = vmatpush1.bf16.msra.mxu0 0
    %158 = vmatprep.subr.bf16.mxu0 0
    %159 = vmatpush1.bf16.msra.mxu0 0
    %160 = vmatprep.subr.bf16.mxu0 0
    %161 = vmatpush1.bf16.msra.mxu0 0
    %162 = vmatprep.subr.bf16.mxu0 0
    %163 = vmatpush1.bf16.msra.mxu0 0
    %164 = vmatprep.subr.bf16.mxu0 0
    %165 = vmatpush1.bf16.msra.mxu0 0
    %166 = vmatprep.subr.bf16.mxu0 0
    %167 = vmatpush1.bf16.msra.mxu0 0
    %168 = vmatprep.mubr.bf16.mxu0 0
    %169 = vmatmul.mubr.bf16.gmra.mrb[0].mxu0 %v134
    %v170 = vpop.f32.mrb[0].mxu0
    %v171 = vadd.f32 %v95, %v170
    %v172 = vpop.f32.mrb[0].mxu0
    %v173 = vadd.f32 %v99, %v172
    %v174 = vpop.f32.mrb[0].mxu0
    %v175 = vadd.f32 %v95, %v174
    %v176 = vpop.f32.mrb[0].mxu0
    %v177 = vadd.f32 %v99, %v176
    %178 = vdwg.mxu0
    %179 = vmatprep.subr.bf16.mxu0 %v127
    %180 = vmatpush1.bf16.msra.mxu0 %v126
    %181 = vmatprep.subr.bf16.mxu0 0
    %182 = vmatpush1.bf16.msra.mxu0 0
    %183 = vmatprep.subr.bf16.mxu0 0
    %184 = vmatpush1.bf16.msra.mxu0 0
    %185 = vmatprep.subr.bf16.mxu0 0
    %186 = vmatpush1.bf16.msra.mxu0 0
    %187 = vmatprep.subr.bf16.mxu0 0
    %188 = vmatpush1.bf16.msra.mxu0 0
    %189 = vmatprep.subr.bf16.mxu0 0
    %190 = vmatpush1.bf16.msra.mxu0 0
    %191 = vmatprep.subr.bf16.mxu0 0
    %192 = vmatpush1.bf16.msra.mxu0 0
    %193 = vmatprep.subr.bf16.mxu0 0
    %194 = vmatpush1.bf16.msra.mxu0 0
    %195 = vmatprep.subr.bf16.mxu0 0
    %196 = vmatpush1.bf16.msra.mxu0 0
    %197 = vmatprep.subr.bf16.mxu0 0
    %198 = vmatpush1.bf16.msra.mxu0 0
    %199 = vmatprep.subr.bf16.mxu0 0
    %200 = vmatpush1.bf16.msra.mxu0 0
    %201 = vmatprep.subr.bf16.mxu0 0
    %202 = vmatpush1.bf16.msra.mxu0 0
    %203 = vmatprep.subr.bf16.mxu0 0
    %204 = vmatpush1.bf16.msra.mxu0 0
    %205 = vmatprep.subr.bf16.mxu0 0
    %206 = vmatpush1.bf16.msra.mxu0 0
    %207 = vmatprep.subr.bf16.mxu0 0
    %208 = vmatpush1.bf16.msra.mxu0 0
    %209 = vmatprep.subr.bf16.mxu0 0
    %210 = vmatpush1.bf16.msra.mxu0 0
    %211 = vmatprep.mubr.bf16.mxu0 0
    %212 = vmatmul.mubr.bf16.gmra.mrb[0].mxu0 %v134
    %v213 = vpop.f32.mrb[0].mxu0
    %v214 = vadd.f32 %v103, %v213
    %v215 = vpop.f32.mrb[0].mxu0
    %v216 = vadd.f32 %v107, %v215
    %v217 = vpop.f32.mrb[0].mxu0
    %v218 = vadd.f32 %v103, %v217
    %v219 = vpop.f32.mrb[0].mxu0
    %v220 = vadd.f32 %v107, %v219
    %221 = vdwg.mxu0
    %v222 = vmax.f32 %v171, 0.0
    %v223 = vmax.f32 %v173, 0.0
    %v224 = vmax.f32 %v214, 0.0
    %v225 = vmax.f32 %v216, 0.0
    %v226 = vmax.f32 %v175, 0.0
    %v227 = vmax.f32 %v177, 0.0
    %v228 = vmax.f32 %v218, 0.0
    %v229 = vmax.f32 %v220, 0.0
    %v230 = vpack.c.bf16 %v226, %v222
    %v231 = vpack.c.bf16 %v227, %v223
    %v232 = vpack.c.bf16 %v228, %v224
    %v233 = vpack.c.bf16 %v229, %v225
    %v234 = vld [vmem:[#allocation7] sm:$0xff]
    %v235 = vld [vmem:[#allocation7 + $0x8] sm:$0xff]
    %v236 = vld [vmem:[#allocation7 + $0x10] sm:$0xff]
    %v237 = vld [vmem:[#allocation7 + $0x18] sm:$0xff]
    %v238 = vld [vmem:[#allocation7 + $0x20] sm:$0xff]
    %v239 = vld [vmem:[#allocation7 + $0x28] sm:$0xff]
    %v240 = vld [vmem:[#allocation7 + $0x30] sm:$0xff]
    %v241 = vld [vmem:[#allocation7 + $0x38] sm:$0xff]
    %v242 = vld [vmem:[#allocation7 + $0x40] sm:$0xff]
    %v243 = vld [vmem:[#allocation7 + $0x48] sm:$0xff]
    %v244 = vld [vmem:[#allocation7 + $0x50] sm:$0xff]
    %v245 = vld [vmem:[#allocation7 + $0x58] sm:$0xff]
    %v246 = vld [vmem:[#allocation7 + $0x60] sm:$0xff]
    %v247 = vld [vmem:[#allocation7 + $0x68] sm:$0xff]
    %v248 = vld [vmem:[#allocation7 + $0x70] sm:$0xff]
    %v249 = vld [vmem:[#allocation7 + $0x78] sm:$0xff]
    %v250 = vld [vmem:[#allocation7 + $0x80] sm:$0xff]
    %v251 = vld [vmem:[#allocation7 + $0x88] sm:$0xff]
    %v252 = vld [vmem:[#allocation7 + $0x90] sm:$0xff]
    %v253 = vld [vmem:[#allocation7 + $0x98] sm:$0xff]
    %v254 = vld [vmem:[#allocation7 + $0xa0] sm:$0xff]
    %v255 = vld [vmem:[#allocation7 + $0xa8] sm:$0xff]
    %v256 = vld [vmem:[#allocation7 + $0xb0] sm:$0xff]
    %v257 = vld [vmem:[#allocation7 + $0xb8] sm:$0xff]
    %v258 = vld [vmem:[#allocation7 + $0xc0] sm:$0xff]
    %v259 = vld [vmem:[#allocation7 + $0xc8] sm:$0xff]
    %v260 = vld [vmem:[#allocation7 + $0xd0] sm:$0xff]
    %v261 = vld [vmem:[#allocation7 + $0xd8] sm:$0xff]
    %v262 = vld [vmem:[#allocation7 + $0xe0] sm:$0xff]
    %v263 = vld [vmem:[#allocation7 + $0xe8] sm:$0xff]
    %v264 = vld [vmem:[#allocation7 + $0xf0] sm:$0xff]
    %v265 = vld [vmem:[#allocation7 + $0xf8] sm:$0xff]
    %v266 = vld [vmem:[#allocation7 + $0x100] sm:$0xff]
    %v267 = vld [vmem:[#allocation7 + $0x108] sm:$0xff]
    %v268 = vld [vmem:[#allocation7 + $0x110] sm:$0xff]
    %v269 = vld [vmem:[#allocation7 + $0x118] sm:$0xff]
    %v270 = vld [vmem:[#allocation7 + $0x120] sm:$0xff]
    %v271 = vld [vmem:[#allocation7 + $0x128] sm:$0xff]
    %v272 = vld [vmem:[#allocation7 + $0x130] sm:$0xff]
    %v273 = vld [vmem:[#allocation7 + $0x138] sm:$0xff]
    %v274 = vld [vmem:[#allocation7 + $0x140] sm:$0xff]
    %v275 = vld [vmem:[#allocation7 + $0x148] sm:$0xff]
    %v276 = vld [vmem:[#allocation7 + $0x150] sm:$0xff]
    %v277 = vld [vmem:[#allocation7 + $0x158] sm:$0xff]
    %v278 = vld [vmem:[#allocation7 + $0x160] sm:$0xff]
    %v279 = vld [vmem:[#allocation7 + $0x168] sm:$0xff]
    %v280 = vld [vmem:[#allocation7 + $0x170] sm:$0xff]
    %v281 = vld [vmem:[#allocation7 + $0x178] sm:$0xff]
    %v282 = vld [vmem:[#allocation7 + $0x180] sm:$0xff]
    %v283 = vld [vmem:[#allocation7 + $0x188] sm:$0xff]
    %v284 = vld [vmem:[#allocation7 + $0x190] sm:$0xff]
    %v285 = vld [vmem:[#allocation7 + $0x198] sm:$0xff]
    %v286 = vld [vmem:[#allocation7 + $0x1a0] sm:$0xff]
    %v287 = vld [vmem:[#allocation7 + $0x1a8] sm:$0xff]
    %v288 = vld [vmem:[#allocation7 + $0x1b0] sm:$0xff]
    %v289 = vld [vmem:[#allocation7 + $0x1b8] sm:$0xff]
    %v290 = vld [vmem:[#allocation7 + $0x1c0] sm:$0xff]
    %v291 = vld [vmem:[#allocation7 + $0x1c8] sm:$0xff]
    %v292 = vld [vmem:[#allocation7 + $0x1d0] sm:$0xff]
    %v293 = vld [vmem:[#allocation7 + $0x1d8] sm:$0xff]
    %v294 = vld [vmem:[#allocation7 + $0x1e0] sm:$0xff]
    %v295 = vld [vmem:[#allocation7 + $0x1e8] sm:$0xff]
    %v296 = vld [vmem:[#allocation7 + $0x1f0] sm:$0xff]
    %v297 = vld [vmem:[#allocation7 + $0x1f8] sm:$0xff]
    %v298 = vld [vmem:[#allocation7 + $0x200] sm:$0xff]
    %v299 = vld [vmem:[#allocation7 + $0x208] sm:$0xff]
    %v300 = vld [vmem:[#allocation7 + $0x210] sm:$0xff]
    %v301 = vld [vmem:[#allocation7 + $0x218] sm:$0xff]
    %v302 = vld [vmem:[#allocation7 + $0x220] sm:$0xff]
    %v303 = vld [vmem:[#allocation7 + $0x228] sm:$0xff]
    %v304 = vld [vmem:[#allocation7 + $0x230] sm:$0xff]
    %v305 = vld [vmem:[#allocation7 + $0x238] sm:$0xff]
    %v306 = vld [vmem:[#allocation7 + $0x240] sm:$0xff]
    %v307 = vld [vmem:[#allocation7 + $0x248] sm:$0xff]
    %v308 = vld [vmem:[#allocation7 + $0x250] sm:$0xff]
    %v309 = vld [vmem:[#allocation7 + $0x258] sm:$0xff]
    %v310 = vld [vmem:[#allocation7 + $0x260] sm:$0xff]
    %v311 = vld [vmem:[#allocation7 + $0x268] sm:$0xff]
    %v312 = vld [vmem:[#allocation7 + $0x270] sm:$0xff]
    %v313 = vld [vmem:[#allocation7 + $0x278] sm:$0xff]
    %v314 = vld [vmem:[#allocation7 + $0x280] sm:$0xff]
    %v315 = vld [vmem:[#allocation7 + $0x288] sm:$0xff]
    %v316 = vld [vmem:[#allocation7 + $0x290] sm:$0xff]
    %v317 = vld [vmem:[#allocation7 + $0x298] sm:$0xff]
    %v318 = vld [vmem:[#allocation7 + $0x2a0] sm:$0xff]
    %v319 = vld [vmem:[#allocation7 + $0x2a8] sm:$0xff]
    %v320 = vld [vmem:[#allocation7 + $0x2b0] sm:$0xff]
    %v321 = vld [vmem:[#allocation7 + $0x2b8] sm:$0xff]
    %v322 = vld [vmem:[#allocation7 + $0x2c0] sm:$0xff]
    %v323 = vld [vmem:[#allocation7 + $0x2c8] sm:$0xff]
    %v324 = vld [vmem:[#allocation7 + $0x2d0] sm:$0xff]
    %v325 = vld [vmem:[#allocation7 + $0x2d8] sm:$0xff]
    %v326 = vld [vmem:[#allocation7 + $0x2e0] sm:$0xff]
    %v327 = vld [vmem:[#allocation7 + $0x2e8] sm:$0xff]
    %v328 = vld [vmem:[#allocation7 + $0x2f0] sm:$0xff]
    %v329 = vld [vmem:[#allocation7 + $0x2f8] sm:$0xff]
    %v330 = vld [vmem:[#allocation7 + $0x300] sm:$0xff]
    %v331 = vld [vmem:[#allocation7 + $0x308] sm:$0xff]
    %v332 = vld [vmem:[#allocation7 + $0x310] sm:$0xff]
    %v333 = vld [vmem:[#allocation7 + $0x318] sm:$0xff]
    %v334 = vld [vmem:[#allocation7 + $0x320] sm:$0xff]
    %v335 = vld [vmem:[#allocation7 + $0x328] sm:$0xff]
    %v336 = vld [vmem:[#allocation7 + $0x330] sm:$0xff]
    %v337 = vld [vmem:[#allocation7 + $0x338] sm:$0xff]
    %v338 = vld [vmem:[#allocation7 + $0x340] sm:$0xff]
    %v339 = vld [vmem:[#allocation7 + $0x348] sm:$0xff]
    %v340 = vld [vmem:[#allocation7 + $0x350] sm:$0xff]
    %v341 = vld [vmem:[#allocation7 + $0x358] sm:$0xff]
    %v342 = vld [vmem:[#allocation7 + $0x360] sm:$0xff]
    %v343 = vld [vmem:[#allocation7 + $0x368] sm:$0xff]
    %v344 = vld [vmem:[#allocation7 + $0x370] sm:$0xff]
    %v345 = vld [vmem:[#allocation7 + $0x378] sm:$0xff]
    %v346 = vld [vmem:[#allocation7 + $0x380] sm:$0xff]
    %v347 = vld [vmem:[#allocation7 + $0x388] sm:$0xff]
    %v348 = vld [vmem:[#allocation7 + $0x390] sm:$0xff]
    %v349 = vld [vmem:[#allocation7 + $0x398] sm:$0xff]
    %v350 = vld [vmem:[#allocation7 + $0x3a0] sm:$0xff]
    %v351 = vld [vmem:[#allocation7 + $0x3a8] sm:$0xff]
    %v352 = vld [vmem:[#allocation7 + $0x3b0] sm:$0xff]
    %v353 = vld [vmem:[#allocation7 + $0x3b8] sm:$0xff]
    %v354 = vld [vmem:[#allocation7 + $0x3c0] sm:$0xff]
    %v355 = vld [vmem:[#allocation7 + $0x3c8] sm:$0xff]
    %v356 = vld [vmem:[#allocation7 + $0x3d0] sm:$0xff]
    %v357 = vld [vmem:[#allocation7 + $0x3d8] sm:$0xff]
    %v358 = vld [vmem:[#allocation7 + $0x3e0] sm:$0xff]
    %v359 = vld [vmem:[#allocation7 + $0x3e8] sm:$0xff]
    %v360 = vld [vmem:[#allocation7 + $0x3f0] sm:$0xff]
    %v361 = vld [vmem:[#allocation7 + $0x3f8] sm:$0xff]
    %v362 = vld [vmem:[%s4] sm:$0xf]
    %v364 = vlaneseq
    %v365 = vshrl.u32 %v364, 7
    %v366 = vsub.s32 0, %v365
    %v367 = vrot.slane %v362, %v366
    %v368 = vlaneseq
    %v369 = vshrl.u32 %v368, 7
    %v370 = vsub.s32 1, %v369
    %v371 = vrot.slane %v362, %v370
    %v372 = vlaneseq
    %v373 = vshrl.u32 %v372, 7
    %v374 = vsub.s32 2, %v373
    %v375 = vrot.slane %v362, %v374
    %v376 = vlaneseq
    %v377 = vshrl.u32 %v376, 7
    %v378 = vsub.s32 3, %v377
    %v379 = vrot.slane %v362, %v378
    %v512 = vunpack.c.l.b16 %v234
    %v513 = vunpack.c.h.b16 %v234
    %v514 = vunpack.c.l.b16 %v235
    %v515 = vunpack.c.h.b16 %v235
    %v516 = vunpack.c.l.b16 %v236
    %v517 = vunpack.c.h.b16 %v236
    %v518 = vunpack.c.l.b16 %v237
    %v519 = vunpack.c.h.b16 %v237
    %v520 = vunpack.c.l.b16 %v238
    %v521 = vunpack.c.h.b16 %v238
    %v522 = vunpack.c.l.b16 %v239
    %v523 = vunpack.c.h.b16 %v239
    %v524 = vunpack.c.l.b16 %v240
    %v525 = vunpack.c.h.b16 %v240
    %v526 = vunpack.c.l.b16 %v241
    %v527 = vunpack.c.h.b16 %v241
    %v528 = vunpack.c.l.b16 %v242
    %v529 = vunpack.c.h.b16 %v242
    %v530 = vunpack.c.l.b16 %v243
    %v531 = vunpack.c.h.b16 %v243
    %v532 = vunpack.c.l.b16 %v244
    %v533 = vunpack.c.h.b16 %v244
    %v534 = vunpack.c.l.b16 %v245
    %v535 = vunpack.c.h.b16 %v245
    %v536 = vunpack.c.l.b16 %v246
    %v537 = vunpack.c.h.b16 %v246
    %v538 = vunpack.c.l.b16 %v247
    %v539 = vunpack.c.h.b16 %v247
    %v540 = vunpack.c.l.b16 %v248
    %v541 = vunpack.c.h.b16 %v248
    %v542 = vunpack.c.l.b16 %v249
    %v543 = vunpack.c.h.b16 %v249
    %v544 = vunpack.c.l.b16 %v250
    %v545 = vunpack.c.h.b16 %v250
    %v546 = vunpack.c.l.b16 %v251
    %v547 = vunpack.c.h.b16 %v251
    %v548 = vunpack.c.l.b16 %v252
    %v549 = vunpack.c.h.b16 %v252
    %v550 = vunpack.c.l.b16 %v253
    %v551 = vunpack.c.h.b16 %v253
    %v552 = vunpack.c.l.b16 %v254
    %v553 = vunpack.c.h.b16 %v254
    %v554 = vunpack.c.l.b16 %v255
    %v555 = vunpack.c.h.b16 %v255
    %v556 = vunpack.c.l.b16 %v256
    %v557 = vunpack.c.h.b16 %v256
    %v558 = vunpack.c.l.b16 %v257
    %v559 = vunpack.c.h.b16 %v257
    %v560 = vunpack.c.l.b16 %v258
    %v561 = vunpack.c.h.b16 %v258
    %v562 = vunpack.c.l.b16 %v259
    %v563 = vunpack.c.h.b16 %v259
    %v564 = vunpack.c.l.b16 %v260
    %v565 = vunpack.c.h.b16 %v260
    %v566 = vunpack.c.l.b16 %v261
    %v567 = vunpack.c.h.b16 %v261
    %v568 = vunpack.c.l.b16 %v262
    %v569 = vunpack.c.h.b16 %v262
    %v570 = vunpack.c.l.b16 %v263
    %v571 = vunpack.c.h.b16 %v263
    %v572 = vunpack.c.l.b16 %v264
    %v573 = vunpack.c.h.b16 %v264
    %v574 = vunpack.c.l.b16 %v265
    %v575 = vunpack.c.h.b16 %v265
    %v576 = vunpack.c.l.b16 %v266
    %v577 = vunpack.c.h.b16 %v266
    %v578 = vunpack.c.l.b16 %v267
    %v579 = vunpack.c.h.b16 %v267
    %v580 = vunpack.c.l.b16 %v268
    %v581 = vunpack.c.h.b16 %v268
    %v582 = vunpack.c.l.b16 %v269
    %v583 = vunpack.c.h.b16 %v269
    %v584 = vunpack.c.l.b16 %v270
    %v585 = vunpack.c.h.b16 %v270
    %v586 = vunpack.c.l.b16 %v271
    %v587 = vunpack.c.h.b16 %v271
    %v588 = vunpack.c.l.b16 %v272
    %v589 = vunpack.c.h.b16 %v272
    %v590 = vunpack.c.l.b16 %v273
    %v591 = vunpack.c.h.b16 %v273
    %v592 = vunpack.c.l.b16 %v274
    %v593 = vunpack.c.h.b16 %v274
    %v594 = vunpack.c.l.b16 %v275
    %v595 = vunpack.c.h.b16 %v275
    %v596 = vunpack.c.l.b16 %v276
    %v597 = vunpack.c.h.b16 %v276
    %v598 = vunpack.c.l.b16 %v277
    %v599 = vunpack.c.h.b16 %v277
    %v600 = vunpack.c.l.b16 %v278
    %v601 = vunpack.c.h.b16 %v278
    %v602 = vunpack.c.l.b16 %v279
    %v603 = vunpack.c.h.b16 %v279
    %v604 = vunpack.c.l.b16 %v280
    %v605 = vunpack.c.h.b16 %v280
    %v606 = vunpack.c.l.b16 %v281
    %v607 = vunpack.c.h.b16 %v281
    %v608 = vunpack.c.l.b16 %v282
    %v609 = vunpack.c.h.b16 %v282
    %v610 = vunpack.c.l.b16 %v283
    %v611 = vunpack.c.h.b16 %v283
    %v612 = vunpack.c.l.b16 %v284
    %v613 = vunpack.c.h.b16 %v284
    %v614 = vunpack.c.l.b16 %v285
    %v615 = vunpack.c.h.b16 %v285
    %v616 = vunpack.c.l.b16 %v286
    %v617 = vunpack.c.h.b16 %v286
    %v618 = vunpack.c.l.b16 %v287
    %v619 = vunpack.c.h.b16 %v287
    %v620 = vunpack.c.l.b16 %v288
    %v621 = vunpack.c.h.b16 %v288
    %v622 = vunpack.c.l.b16 %v289
    %v623 = vunpack.c.h.b16 %v289
    %v624 = vunpack.c.l.b16 %v290
    %v625 = vunpack.c.h.b16 %v290
    %v626 = vunpack.c.l.b16 %v291
    %v627 = vunpack.c.h.b16 %v291
    %v628 = vunpack.c.l.b16 %v292
    %v629 = vunpack.c.h.b16 %v292
    %v630 = vunpack.c.l.b16 %v293
    %v631 = vunpack.c.h.b16 %v293
    %v632 = vunpack.c.l.b16 %v294
    %v633 = vunpack.c.h.b16 %v294
    %v634 = vunpack.c.l.b16 %v295
    %v635 = vunpack.c.h.b16 %v295
    %v636 = vunpack.c.l.b16 %v296
    %v637 = vunpack.c.h.b16 %v296
    %v638 = vunpack.c.l.b16 %v297
    %v639 = vunpack.c.h.b16 %v297
    %v640 = vunpack.c.l.b16 %v298
    %v641 = vunpack.c.h.b16 %v298
    %v642 = vunpack.c.l.b16 %v299
    %v643 = vunpack.c.h.b16 %v299
    %v644 = vunpack.c.l.b16 %v300
    %v645 = vunpack.c.h.b16 %v300
    %v646 = vunpack.c.l.b16 %v301
    %v647 = vunpack.c.h.b16 %v301
    %v648 = vunpack.c.l.b16 %v302
    %v649 = vunpack.c.h.b16 %v302
    %v650 = vunpack.c.l.b16 %v303
    %v651 = vunpack.c.h.b16 %v303
    %v652 = vunpack.c.l.b16 %v304
    %v653 = vunpack.c.h.b16 %v304
    %v654 = vunpack.c.l.b16 %v305
    %v655 = vunpack.c.h.b16 %v305
    %v656 = vunpack.c.l.b16 %v306
    %v657 = vunpack.c.h.b16 %v306
    %v658 = vunpack.c.l.b16 %v307
    %v659 = vunpack.c.h.b16 %v307
    %v660 = vunpack.c.l.b16 %v308
    %v661 = vunpack.c.h.b16 %v308
    %v662 = vunpack.c.l.b16 %v309
    %v663 = vunpack.c.h.b16 %v309
    %v664 = vunpack.c.l.b16 %v310
    %v665 = vunpack.c.h.b16 %v310
    %v666 = vunpack.c.l.b16 %v311
    %v667 = vunpack.c.h.b16 %v311
    %v668 = vunpack.c.l.b16 %v312
    %v669 = vunpack.c.h.b16 %v312
    %v670 = vunpack.c.l.b16 %v313
    %v671 = vunpack.c.h.b16 %v313
    %v672 = vunpack.c.l.b16 %v314
    %v673 = vunpack.c.h.b16 %v314
    %v674 = vunpack.c.l.b16 %v315
    %v675 = vunpack.c.h.b16 %v315
    %v676 = vunpack.c.l.b16 %v316
    %v677 = vunpack.c.h.b16 %v316
    %v678 = vunpack.c.l.b16 %v317
    %v679 = vunpack.c.h.b16 %v317
    %v680 = vunpack.c.l.b16 %v318
    %v681 = vunpack.c.h.b16 %v318
    %v682 = vunpack.c.l.b16 %v319
    %v683 = vunpack.c.h.b16 %v319
    %v684 = vunpack.c.l.b16 %v320
    %v685 = vunpack.c.h.b16 %v320
    %v686 = vunpack.c.l.b16 %v321
    %v687 = vunpack.c.h.b16 %v321
    %v688 = vunpack.c.l.b16 %v322
    %v689 = vunpack.c.h.b16 %v322
    %v690 = vunpack.c.l.b16 %v323
    %v691 = vunpack.c.h.b16 %v323
    %v692 = vunpack.c.l.b16 %v324
    %v693 = vunpack.c.h.b16 %v324
    %v694 = vunpack.c.l.b16 %v325
    %v695 = vunpack.c.h.b16 %v325
    %v696 = vunpack.c.l.b16 %v326
    %v697 = vunpack.c.h.b16 %v326
    %v698 = vunpack.c.l.b16 %v327
    %v699 = vunpack.c.h.b16 %v327
    %v700 = vunpack.c.l.b16 %v328
    %v701 = vunpack.c.h.b16 %v328
    %v702 = vunpack.c.l.b16 %v329
    %v703 = vunpack.c.h.b16 %v329
    %v704 = vunpack.c.l.b16 %v330
    %v705 = vunpack.c.h.b16 %v330
    %v706 = vunpack.c.l.b16 %v331
    %v707 = vunpack.c.h.b16 %v331
    %v708 = vunpack.c.l.b16 %v332
    %v709 = vunpack.c.h.b16 %v332
    %v710 = vunpack.c.l.b16 %v333
    %v711 = vunpack.c.h.b16 %v333
    %v712 = vunpack.c.l.b16 %v334
    %v713 = vunpack.c.h.b16 %v334
    %v714 = vunpack.c.l.b16 %v335
    %v715 = vunpack.c.h.b16 %v335
    %v716 = vunpack.c.l.b16 %v336
    %v717 = vunpack.c.h.b16 %v336
    %v718 = vunpack.c.l.b16 %v337
    %v719 = vunpack.c.h.b16 %v337
    %v720 = vunpack.c.l.b16 %v338
    %v721 = vunpack.c.h.b16 %v338
    %v722 = vunpack.c.l.b16 %v339
    %v723 = vunpack.c.h.b16 %v339
    %v724 = vunpack.c.l.b16 %v340
    %v725 = vunpack.c.h.b16 %v340
    %v726 = vunpack.c.l.b16 %v341
    %v727 = vunpack.c.h.b16 %v341
    %v728 = vunpack.c.l.b16 %v342
    %v729 = vunpack.c.h.b16 %v342
    %v730 = vunpack.c.l.b16 %v343
    %v731 = vunpack.c.h.b16 %v343
    %v732 = vunpack.c.l.b16 %v344
    %v733 = vunpack.c.h.b16 %v344
    %v734 = vunpack.c.l.b16 %v345
    %v735 = vunpack.c.h.b16 %v345
    %v736 = vunpack.c.l.b16 %v346
    %v737 = vunpack.c.h.b16 %v346
    %v738 = vunpack.c.l.b16 %v347
    %v739 = vunpack.c.h.b16 %v347
    %v740 = vunpack.c.l.b16 %v348
    %v741 = vunpack.c.h.b16 %v348
    %v742 = vunpack.c.l.b16 %v349
    %v743 = vunpack.c.h.b16 %v349
    %v744 = vunpack.c.l.b16 %v350
    %v745 = vunpack.c.h.b16 %v350
    %v746 = vunpack.c.l.b16 %v351
    %v747 = vunpack.c.h.b16 %v351
    %v748 = vunpack.c.l.b16 %v352
    %v749 = vunpack.c.h.b16 %v352
    %v750 = vunpack.c.l.b16 %v353
    %v751 = vunpack.c.h.b16 %v353
    %v752 = vunpack.c.l.b16 %v354
    %v753 = vunpack.c.h.b16 %v354
    %v754 = vunpack.c.l.b16 %v355
    %v755 = vunpack.c.h.b16 %v355
    %v756 = vunpack.c.l.b16 %v356
    %v757 = vunpack.c.h.b16 %v356
    %v758 = vunpack.c.l.b16 %v357
    %v759 = vunpack.c.h.b16 %v357
    %v760 = vunpack.c.l.b16 %v358
    %v761 = vunpack.c.h.b16 %v358
    %v762 = vunpack.c.l.b16 %v359
    %v763 = vunpack.c.h.b16 %v359
    %v764 = vunpack.c.l.b16 %v360
    %v765 = vunpack.c.h.b16 %v360
    %v766 = vunpack.c.l.b16 %v361
    %v767 = vunpack.c.h.b16 %v361
    %v768 = vpack.c.b16 %v516, %v512
    %v769 = vpack.c.b16 %v517, %v513
    %v770 = vpack.c.b16 %v518, %v514
    %v771 = vpack.c.b16 %v519, %v515
    %v772 = vpack.c.b16 %v524, %v520
    %v773 = vpack.c.b16 %v525, %v521
    %v774 = vpack.c.b16 %v526, %v522
    %v775 = vpack.c.b16 %v527, %v523
    %v776 = vpack.c.b16 %v532, %v528
    %v777 = vpack.c.b16 %v533, %v529
    %v778 = vpack.c.b16 %v534, %v530
    %v779 = vpack.c.b16 %v535, %v531
    %v780 = vpack.c.b16 %v540, %v536
    %v781 = vpack.c.b16 %v541, %v537
    %v782 = vpack.c.b16 %v542, %v538
    %v783 = vpack.c.b16 %v543, %v539
    %v784 = vpack.c.b16 %v548, %v544
    %v785 = vpack.c.b16 %v549, %v545
    %v786 = vpack.c.b16 %v550, %v546
    %v787 = vpack.c.b16 %v551, %v547
    %v788 = vpack.c.b16 %v556, %v552
    %v789 = vpack.c.b16 %v557, %v553
    %v790 = vpack.c.b16 %v558, %v554
    %v791 = vpack.c.b16 %v559, %v555
    %v792 = vpack.c.b16 %v564, %v560
    %v793 = vpack.c.b16 %v565, %v561
    %v794 = vpack.c.b16 %v566, %v562
    %v795 = vpack.c.b16 %v567, %v563
    %v796 = vpack.c.b16 %v572, %v568
    %v797 = vpack.c.b16 %v573, %v569
    %v798 = vpack.c.b16 %v574, %v570
    %v799 = vpack.c.b16 %v575, %v571
    %v800 = vpack.c.b16 %v580, %v576
    %v801 = vpack.c.b16 %v581, %v577
    %v802 = vpack.c.b16 %v582, %v578
    %v803 = vpack.c.b16 %v583, %v579
    %v804 = vpack.c.b16 %v588, %v584
    %v805 = vpack.c.b16 %v589, %v585
    %v806 = vpack.c.b16 %v590, %v586
    %v807 = vpack.c.b16 %v591, %v587
    %v808 = vpack.c.b16 %v596, %v592
    %v809 = vpack.c.b16 %v597, %v593
    %v810 = vpack.c.b16 %v598, %v594
    %v811 = vpack.c.b16 %v599, %v595
    %v812 = vpack.c.b16 %v604, %v600
    %v813 = vpack.c.b16 %v605, %v601
    %v814 = vpack.c.b16 %v606, %v602
    %v815 = vpack.c.b16 %v607, %v603
    %v816 = vpack.c.b16 %v612, %v608
    %v817 = vpack.c.b16 %v613, %v609
    %v818 = vpack.c.b16 %v614, %v610
    %v819 = vpack.c.b16 %v615, %v611
    %v820 = vpack.c.b16 %v620, %v616
    %v821 = vpack.c.b16 %v621, %v617
    %v822 = vpack.c.b16 %v622, %v618
    %v823 = vpack.c.b16 %v623, %v619
    %v824 = vpack.c.b16 %v628, %v624
    %v825 = vpack.c.b16 %v629, %v625
    %v826 = vpack.c.b16 %v630, %v626
    %v827 = vpack.c.b16 %v631, %v627
    %v828 = vpack.c.b16 %v636, %v632
    %v829 = vpack.c.b16 %v637, %v633
    %v830 = vpack.c.b16 %v638, %v634
    %v831 = vpack.c.b16 %v639, %v635
    %v832 = vpack.c.b16 %v644, %v640
    %v833 = vpack.c.b16 %v645, %v641
    %v834 = vpack.c.b16 %v646, %v642
    %v835 = vpack.c.b16 %v647, %v643
    %v836 = vpack.c.b16 %v652, %v648
    %v837 = vpack.c.b16 %v653, %v649
    %v838 = vpack.c.b16 %v654, %v650
    %v839 = vpack.c.b16 %v655, %v651
    %v840 = vpack.c.b16 %v660, %v656
    %v841 = vpack.c.b16 %v661, %v657
    %v842 = vpack.c.b16 %v662, %v658
    %v843 = vpack.c.b16 %v663, %v659
    %v844 = vpack.c.b16 %v668, %v664
    %v845 = vpack.c.b16 %v669, %v665
    %v846 = vpack.c.b16 %v670, %v666
    %v847 = vpack.c.b16 %v671, %v667
    %v848 = vpack.c.b16 %v676, %v672
    %v849 = vpack.c.b16 %v677, %v673
    %v850 = vpack.c.b16 %v678, %v674
    %v851 = vpack.c.b16 %v679, %v675
    %v852 = vpack.c.b16 %v684, %v680
    %v853 = vpack.c.b16 %v685, %v681
    %v854 = vpack.c.b16 %v686, %v682
    %v855 = vpack.c.b16 %v687, %v683
    %v856 = vpack.c.b16 %v692, %v688
    %v857 = vpack.c.b16 %v693, %v689
    %v858 = vpack.c.b16 %v694, %v690
    %v859 = vpack.c.b16 %v695, %v691
    %v860 = vpack.c.b16 %v700, %v696
    %v861 = vpack.c.b16 %v701, %v697
    %v862 = vpack.c.b16 %v702, %v698
    %v863 = vpack.c.b16 %v703, %v699
    %v864 = vpack.c.b16 %v708, %v704
    %v865 = vpack.c.b16 %v709, %v705
    %v866 = vpack.c.b16 %v710, %v706
    %v867 = vpack.c.b16 %v711, %v707
    %v868 = vpack.c.b16 %v716, %v712
    %v869 = vpack.c.b16 %v717, %v713
    %v870 = vpack.c.b16 %v718, %v714
    %v871 = vpack.c.b16 %v719, %v715
    %v872 = vpack.c.b16 %v724, %v720
    %v873 = vpack.c.b16 %v725, %v721
    %v874 = vpack.c.b16 %v726, %v722
    %v875 = vpack.c.b16 %v727, %v723
    %v876 = vpack.c.b16 %v732, %v728
    %v877 = vpack.c.b16 %v733, %v729
    %v878 = vpack.c.b16 %v734, %v730
    %v879 = vpack.c.b16 %v735, %v731
    %v880 = vpack.c.b16 %v740, %v736
    %v881 = vpack.c.b16 %v741, %v737
    %v882 = vpack.c.b16 %v742, %v738
    %v883 = vpack.c.b16 %v743, %v739
    %v884 = vpack.c.b16 %v748, %v744
    %v885 = vpack.c.b16 %v749, %v745
    %v886 = vpack.c.b16 %v750, %v746
    %v887 = vpack.c.b16 %v751, %v747
    %v888 = vpack.c.b16 %v756, %v752
    %v889 = vpack.c.b16 %v757, %v753
    %v890 = vpack.c.b16 %v758, %v754
    %v891 = vpack.c.b16 %v759, %v755
    %v892 = vpack.c.b16 %v764, %v760
    %v893 = vpack.c.b16 %v765, %v761
    %v894 = vpack.c.b16 %v766, %v762
    %v895 = vpack.c.b16 %v767, %v763
    %1024 = vmatprep.subr.bf16.mxu0 %v769
    %1025 = vmatpush1.bf16.msra.mxu0 %v768
    %1026 = vmatprep.subr.bf16.mxu0 %v773
    %1027 = vmatpush1.bf16.msra.mxu0 %v772
    %1028 = vmatprep.subr.bf16.mxu0 %v777
    %1029 = vmatpush1.bf16.msra.mxu0 %v776
    %1030 = vmatprep.subr.bf16.mxu0 %v781
    %1031 = vmatpush1.bf16.msra.mxu0 %v780
    %1032 = vmatprep.subr.bf16.mxu0 %v785
    %1033 = vmatpush1.bf16.msra.mxu0 %v784
    %1034 = vmatprep.subr.bf16.mxu0 %v789
    %1035 = vmatpush1.bf16.msra.mxu0 %v788
    %1036 = vmatprep.subr.bf16.mxu0 %v793
    %1037 = vmatpush1.bf16.msra.mxu0 %v792
    %1038 = vmatprep.subr.bf16.mxu0 %v797
    %1039 = vmatpush1.bf16.msra.mxu0 %v796
    %1040 = vmatprep.subr.bf16.mxu0 %v801
    %1041 = vmatpush1.bf16.msra.mxu0 %v800
    %1042 = vmatprep.subr.bf16.mxu0 %v805
    %1043 = vmatpush1.bf16.msra.mxu0 %v804
    %1044 = vmatprep.subr.bf16.mxu0 %v809
    %1045 = vmatpush1.bf16.msra.mxu0 %v808
    %1046 = vmatprep.subr.bf16.mxu0 %v813
    %1047 = vmatpush1.bf16.msra.mxu0 %v812
    %1048 = vmatprep.subr.bf16.mxu0 %v817
    %1049 = vmatpush1.bf16.msra.mxu0 %v816
    %1050 = vmatprep.subr.bf16.mxu0 %v821
    %1051 = vmatpush1.bf16.msra.mxu0 %v820
    %1052 = vmatprep.subr.bf16.mxu0 %v825
    %1053 = vmatpush1.bf16.msra.mxu0 %v824
    %1054 = vmatprep.subr.bf16.mxu0 %v829
    %1055 = vmatpush1.bf16.msra.mxu0 %v828
    %1056 = vmatprep.mubr.bf16.mxu0 %v231
    %1057 = vmatmul.mubr.bf16.gmra.mrb[0].mxu0 %v230
    %v1058 = vpop.f32.mrb[0].mxu0
    %v1059 = vadd.f32 %v367, %v1058
    %v1060 = vpop.f32.mrb[0].mxu0
    %v1061 = vadd.f32 %v371, %v1060
    %v1062 = vpop.f32.mrb[0].mxu0
    %v1063 = vadd.f32 %v367, %v1062
    %v1064 = vpop.f32.mrb[0].mxu0
    %v1065 = vadd.f32 %v371, %v1064
    %1066 = vdwg.mxu0
    %1067 = vmatprep.subr.bf16.mxu0 %v833
    %1068 = vmatpush1.bf16.msra.mxu0 %v832
    %1069 = vmatprep.subr.bf16.mxu0 %v837
    %1070 = vmatpush1.bf16.msra.mxu0 %v836
    %1071 = vmatprep.subr.bf16.mxu0 %v841
    %1072 = vmatpush1.bf16.msra.mxu0 %v840
    %1073 = vmatprep.subr.bf16.mxu0 %v845
    %1074 = vmatpush1.bf16.msra.mxu0 %v844
    %1075 = vmatprep.subr.bf16.mxu0 %v849
    %1076 = vmatpush1.bf16.msra.mxu0 %v848
    %1077 = vmatprep.subr.bf16.mxu0 %v853
    %1078 = vmatpush1.bf16.msra.mxu0 %v852
    %1079 = vmatprep.subr.bf16.mxu0 %v857
    %1080 = vmatpush1.bf16.msra.mxu0 %v856
    %1081 = vmatprep.subr.bf16.mxu0 %v861
    %1082 = vmatpush1.bf16.msra.mxu0 %v860
    %1083 = vmatprep.subr.bf16.mxu0 %v865
    %1084 = vmatpush1.bf16.msra.mxu0 %v864
    %1085 = vmatprep.subr.bf16.mxu0 %v869
    %1086 = vmatpush1.bf16.msra.mxu0 %v868
    %1087 = vmatprep.subr.bf16.mxu0 %v873
    %1088 = vmatpush1.bf16.msra.mxu0 %v872
    %1089 = vmatprep.subr.bf16.mxu0 %v877
    %1090 = vmatpush1.bf16.msra.mxu0 %v876
    %1091 = vmatprep.subr.bf16.mxu0 %v881
    %1092 = vmatpush1.bf16.msra.mxu0 %v880
    %1093 = vmatprep.subr.bf16.mxu0 %v885
    %1094 = vmatpush1.bf16.msra.mxu0 %v884
    %1095 = vmatprep.subr.bf16.mxu0 %v889
    %1096 = vmatpush1.bf16.msra.mxu0 %v888
    %1097 = vmatprep.subr.bf16.mxu0 %v893
    %1098 = vmatpush1.bf16.msra.mxu0 %v892
    %1099 = vmatprep.mubr.bf16.mxu0 %v233
    %1100 = vmatmul.mubr.bf16.gmra.mrb[0].mxu0 %v232
    %v1101 = vpop.f32.mrb[0].mxu0
    %v1102 = vadd.f32 %v1059, %v1101
    %v1103 = vpop.f32.mrb[0].mxu0
    %v1104 = vadd.f32 %v1061, %v1103
    %v1105 = vpop.f32.mrb[0].mxu0
    %v1106 = vadd.f32 %v1063, %v1105
    %v1107 = vpop.f32.mrb[0].mxu0
    %v1108 = vadd.f32 %v1065, %v1107
    %1109 = vdwg.mxu0
    %1110 = vmatprep.subr.bf16.mxu0 %v771
    %1111 = vmatpush1.bf16.msra.mxu0 %v770
    %1112 = vmatprep.subr.bf16.mxu0 %v775
    %1113 = vmatpush1.bf16.msra.mxu0 %v774
    %1114 = vmatprep.subr.bf16.mxu0 %v779
    %1115 = vmatpush1.bf16.msra.mxu0 %v778
    %1116 = vmatprep.subr.bf16.mxu0 %v783
    %1117 = vmatpush1.bf16.msra.mxu0 %v782
    %1118 = vmatprep.subr.bf16.mxu0 %v787
    %1119 = vmatpush1.bf16.msra.mxu0 %v786
    %1120 = vmatprep.subr.bf16.mxu0 %v791
    %1121 = vmatpush1.bf16.msra.mxu0 %v790
    %1122 = vmatprep.subr.bf16.mxu0 %v795
    %1123 = vmatpush1.bf16.msra.mxu0 %v794
    %1124 = vmatprep.subr.bf16.mxu0 %v799
    %1125 = vmatpush1.bf16.msra.mxu0 %v798
    %1126 = vmatprep.subr.bf16.mxu0 %v803
    %1127 = vmatpush1.bf16.msra.mxu0 %v802
    %1128 = vmatprep.subr.bf16.mxu0 %v807
    %1129 = vmatpush1.bf16.msra.mxu0 %v806
    %1130 = vmatprep.subr.bf16.mxu0 %v811
    %1131 = vmatpush1.bf16.msra.mxu0 %v810
    %1132 = vmatprep.subr.bf16.mxu0 %v815
    %1133 = vmatpush1.bf16.msra.mxu0 %v814
    %1134 = vmatprep.subr.bf16.mxu0 %v819
    %1135 = vmatpush1.bf16.msra.mxu0 %v818
    %1136 = vmatprep.subr.bf16.mxu0 %v823
    %1137 = vmatpush1.bf16.msra.mxu0 %v822
    %1138 = vmatprep.subr.bf16.mxu0 %v827
    %1139 = vmatpush1.bf16.msra.mxu0 %v826
    %1140 = vmatprep.subr.bf16.mxu0 %v831
    %1141 = vmatpush1.bf16.msra.mxu0 %v830
    %1142 = vmatprep.mubr.bf16.mxu0 %v231
    %1143 = vmatmul.mubr.bf16.gmra.mrb[0].mxu0 %v230
    %v1144 = vpop.f32.mrb[0].mxu0
    %v1145 = vadd.f32 %v375, %v1144
    %v1146 = vpop.f32.mrb[0].mxu0
    %v1147 = vadd.f32 %v379, %v1146
    %v1148 = vpop.f32.mrb[0].mxu0
    %v1149 = vadd.f32 %v375, %v1148
    %v1150 = vpop.f32.mrb[0].mxu0
    %v1151 = vadd.f32 %v379, %v1150
    %1152 = vdwg.mxu0
    %1153 = vmatprep.subr.bf16.mxu0 %v835
    %1154 = vmatpush1.bf16.msra.mxu0 %v834
    %1155 = vmatprep.subr.bf16.mxu0 %v839
    %1156 = vmatpush1.bf16.msra.mxu0 %v838
    %1157 = vmatprep.subr.bf16.mxu0 %v843
    %1158 = vmatpush1.bf16.msra.mxu0 %v842
    %1159 = vmatprep.subr.bf16.mxu0 %v847
    %1160 = vmatpush1.bf16.msra.mxu0 %v846
    %1161 = vmatprep.subr.bf16.mxu0 %v851
    %1162 = vmatpush1.bf16.msra.mxu0 %v850
    %1163 = vmatprep.subr.bf16.mxu0 %v855
    %1164 = vmatpush1.bf16.msra.mxu0 %v854
    %1165 = vmatprep.subr.bf16.mxu0 %v859
    %1166 = vmatpush1.bf16.msra.mxu0 %v858
    %1167 = vmatprep.subr.bf16.mxu0 %v863
    %1168 = vmatpush1.bf16.msra.mxu0 %v862
    %1169 = vmatprep.subr.bf16.mxu0 %v867
    %1170 = vmatpush1.bf16.msra.mxu0 %v866
    %1171 = vmatprep.subr.bf16.mxu0 %v871
    %1172 = vmatpush1.bf16.msra.mxu0 %v870
    %1173 = vmatprep.subr.bf16.mxu0 %v875
    %1174 = vmatpush1.bf16.msra.mxu0 %v874
    %1175 = vmatprep.subr.bf16.mxu0 %v879
    %1176 = vmatpush1.bf16.msra.mxu0 %v878
    %1177 = vmatprep.subr.bf16.mxu0 %v883
    %1178 = vmatpush1.bf16.msra.mxu0 %v882
    %1179 = vmatprep.subr.bf16.mxu0 %v887
    %1180 = vmatpush1.bf16.msra.mxu0 %v886
    %1181 = vmatprep.subr.bf16.mxu0 %v891
    %1182 = vmatpush1.bf16.msra.mxu0 %v890
    %1183 = vmatprep.subr.bf16.mxu0 %v895
    %1184 = vmatpush1.bf16.msra.mxu0 %v894
    %1185 = vmatprep.mubr.bf16.mxu0 %v233
    %1186 = vmatmul.mubr.bf16.gmra.mrb[0].mxu0 %v232
    %v1187 = vpop.f32.mrb[0].mxu0
    %v1188 = vadd.f32 %v1145, %v1187
    %v1189 = vpop.f32.mrb[0].mxu0
    %v1190 = vadd.f32 %v1147, %v1189
    %v1191 = vpop.f32.mrb[0].mxu0
    %v1192 = vadd.f32 %v1149, %v1191
    %v1193 = vpop.f32.mrb[0].mxu0
    %v1194 = vadd.f32 %v1151, %v1193
    %1195 = vdwg.mxu0
    %v1196 = vmax.f32 %v1102, 0.0
    %v1197 = vmax.f32 %v1104, 0.0
    %v1198 = vmax.f32 %v1188, 0.0
    %v1199 = vmax.f32 %v1190, 0.0
    %v1200 = vmax.f32 %v1106, 0.0
    %v1201 = vmax.f32 %v1108, 0.0
    %v1202 = vmax.f32 %v1192, 0.0
    %v1203 = vmax.f32 %v1194, 0.0
    %v1204 = vpack.c.bf16 %v1200, %v1196
    %v1205 = vpack.c.bf16 %v1201, %v1197
    %v1206 = vpack.c.bf16 %v1202, %v1198
    %v1207 = vpack.c.bf16 %v1203, %v1199
    %v1208 = vld [vmem:[#allocation8] sm:$0xf]
    %v1209 = vld [vmem:[#allocation8 + $0x4] sm:$0xf]
    %v1210 = vld [vmem:[#allocation8 + $0x8] sm:$0xf]
    %v1211 = vld [vmem:[#allocation8 + $0xc] sm:$0xf]
    %v1212 = vld [vmem:[#allocation8 + $0x10] sm:$0xf]
    %v1213 = vld [vmem:[#allocation8 + $0x14] sm:$0xf]
    %v1214 = vld [vmem:[#allocation8 + $0x18] sm:$0xf]
    %v1215 = vld [vmem:[#allocation8 + $0x1c] sm:$0xf]
    %v1216 = vld [vmem:[#allocation8 + $0x20] sm:$0xf]
    %v1217 = vld [vmem:[#allocation8 + $0x24] sm:$0xf]
    %v1218 = vld [vmem:[#allocation8 + $0x28] sm:$0xf]
    %v1219 = vld [vmem:[#allocation8 + $0x2c] sm:$0xf]
    %v1220 = vld [vmem:[#allocation8 + $0x30] sm:$0xf]
    %v1221 = vld [vmem:[#allocation8 + $0x34] sm:$0xf]
    %v1222 = vld [vmem:[#allocation8 + $0x38] sm:$0xf]
    %v1223 = vld [vmem:[#allocation8 + $0x3c] sm:$0xf]
    %v1224 = vld [vmem:[#allocation8 + $0x40] sm:$0xf]
    %v1225 = vld [vmem:[#allocation8 + $0x44] sm:$0xf]
    %v1226 = vld [vmem:[#allocation8 + $0x48] sm:$0xf]
    %v1227 = vld [vmem:[#allocation8 + $0x4c] sm:$0xf]
    %v1228 = vld [vmem:[#allocation8 + $0x50] sm:$0xf]
    %v1229 = vld [vmem:[#allocation8 + $0x54] sm:$0xf]
    %v1230 = vld [vmem:[#allocation8 + $0x58] sm:$0xf]
    %v1231 = vld [vmem:[#allocation8 + $0x5c] sm:$0xf]
    %v1232 = vld [vmem:[#allocation8 + $0x60] sm:$0xf]
    %v1233 = vld [vmem:[#allocation8 + $0x64] sm:$0xf]
    %v1234 = vld [vmem:[#allocation8 + $0x68] sm:$0xf]
    %v1235 = vld [vmem:[#allocation8 + $0x6c] sm:$0xf]
    %v1236 = vld [vmem:[#allocation8 + $0x70] sm:$0xf]
    %v1237 = vld [vmem:[#allocation8 + $0x74] sm:$0xf]
    %v1238 = vld [vmem:[#allocation8 + $0x78] sm:$0xf]
    %v1239 = vld [vmem:[#allocation8 + $0x7c] sm:$0xf]
    %v1240 = vld [vmem:[#allocation8 + $0x80] sm:$0xf]
    %v1241 = vld [vmem:[#allocation8 + $0x84] sm:$0xf]
    %v1242 = vld [vmem:[#allocation8 + $0x88] sm:$0xf]
    %v1243 = vld [vmem:[#allocation8 + $0x8c] sm:$0xf]
    %v1244 = vld [vmem:[#allocation8 + $0x90] sm:$0xf]
    %v1245 = vld [vmem:[#allocation8 + $0x94] sm:$0xf]
    %v1246 = vld [vmem:[#allocation8 + $0x98] sm:$0xf]
    %v1247 = vld [vmem:[#allocation8 + $0x9c] sm:$0xf]
    %v1248 = vld [vmem:[#allocation8 + $0xa0] sm:$0xf]
    %v1249 = vld [vmem:[#allocation8 + $0xa4] sm:$0xf]
    %v1250 = vld [vmem:[#allocation8 + $0xa8] sm:$0xf]
    %v1251 = vld [vmem:[#allocation8 + $0xac] sm:$0xf]
    %v1252 = vld [vmem:[#allocation8 + $0xb0] sm:$0xf]
    %v1253 = vld [vmem:[#allocation8 + $0xb4] sm:$0xf]
    %v1254 = vld [vmem:[#allocation8 + $0xb8] sm:$0xf]
    %v1255 = vld [vmem:[#allocation8 + $0xbc] sm:$0xf]
    %v1256 = vld [vmem:[#allocation8 + $0xc0] sm:$0xf]
    %v1257 = vld [vmem:[#allocation8 + $0xc4] sm:$0xf]
    %v1258 = vld [vmem:[#allocation8 + $0xc8] sm:$0xf]
    %v1259 = vld [vmem:[#allocation8 + $0xcc] sm:$0xf]
    %v1260 = vld [vmem:[#allocation8 + $0xd0] sm:$0xf]
    %v1261 = vld [vmem:[#allocation8 + $0xd4] sm:$0xf]
    %v1262 = vld [vmem:[#allocation8 + $0xd8] sm:$0xf]
    %v1263 = vld [vmem:[#allocation8 + $0xdc] sm:$0xf]
    %v1264 = vld [vmem:[#allocation8 + $0xe0] sm:$0xf]
    %v1265 = vld [vmem:[#allocation8 + $0xe4] sm:$0xf]
    %v1266 = vld [vmem:[#allocation8 + $0xe8] sm:$0xf]
    %v1267 = vld [vmem:[#allocation8 + $0xec] sm:$0xf]
    %v1268 = vld [vmem:[#allocation8 + $0xf0] sm:$0xf]
    %v1269 = vld [vmem:[#allocation8 + $0xf4] sm:$0xf]
    %v1270 = vld [vmem:[#allocation8 + $0xf8] sm:$0xf]
    %v1271 = vld [vmem:[#allocation8 + $0xfc] sm:$0xf]
    %v1272 = vld [vmem:[%s6] sm:$0x1]
    %v1274 = vlaneseq
    %v1275 = vshrl.u32 %v1274, 7
    %v1276 = vsub.s32 0, %v1275
    %v1277 = vrot.slane %v1272, %v1276
    %v1343 = vunpack.c.l.b16 %v1208
    %v1344 = vunpack.c.l.b16 %v1209
    %v1345 = vunpack.c.l.b16 %v1210
    %v1346 = vunpack.c.l.b16 %v1211
    %v1347 = vunpack.c.l.b16 %v1212
    %v1348 = vunpack.c.l.b16 %v1213
    %v1349 = vunpack.c.l.b16 %v1214
    %v1350 = vunpack.c.l.b16 %v1215
    %v1351 = vunpack.c.l.b16 %v1216
    %v1352 = vunpack.c.l.b16 %v1217
    %v1353 = vunpack.c.l.b16 %v1218
    %v1354 = vunpack.c.l.b16 %v1219
    %v1355 = vunpack.c.l.b16 %v1220
    %v1356 = vunpack.c.l.b16 %v1221
    %v1357 = vunpack.c.l.b16 %v1222
    %v1358 = vunpack.c.l.b16 %v1223
    %v1359 = vunpack.c.l.b16 %v1224
    %v1360 = vunpack.c.l.b16 %v1225
    %v1361 = vunpack.c.l.b16 %v1226
    %v1362 = vunpack.c.l.b16 %v1227
    %v1363 = vunpack.c.l.b16 %v1228
    %v1364 = vunpack.c.l.b16 %v1229
    %v1365 = vunpack.c.l.b16 %v1230
    %v1366 = vunpack.c.l.b16 %v1231
    %v1367 = vunpack.c.l.b16 %v1232
    %v1368 = vunpack.c.l.b16 %v1233
    %v1369 = vunpack.c.l.b16 %v1234
    %v1370 = vunpack.c.l.b16 %v1235
    %v1371 = vunpack.c.l.b16 %v1236
    %v1372 = vunpack.c.l.b16 %v1237
    %v1373 = vunpack.c.l.b16 %v1238
    %v1374 = vunpack.c.l.b16 %v1239
    %v1375 = vunpack.c.l.b16 %v1240
    %v1376 = vunpack.c.l.b16 %v1241
    %v1377 = vunpack.c.l.b16 %v1242
    %v1378 = vunpack.c.l.b16 %v1243
    %v1379 = vunpack.c.l.b16 %v1244
    %v1380 = vunpack.c.l.b16 %v1245
    %v1381 = vunpack.c.l.b16 %v1246
    %v1382 = vunpack.c.l.b16 %v1247
    %v1383 = vunpack.c.l.b16 %v1248
    %v1384 = vunpack.c.l.b16 %v1249
    %v1385 = vunpack.c.l.b16 %v1250
    %v1386 = vunpack.c.l.b16 %v1251
    %v1387 = vunpack.c.l.b16 %v1252
    %v1388 = vunpack.c.l.b16 %v1253
    %v1389 = vunpack.c.l.b16 %v1254
    %v1390 = vunpack.c.l.b16 %v1255
    %v1391 = vunpack.c.l.b16 %v1256
    %v1392 = vunpack.c.l.b16 %v1257
    %v1393 = vunpack.c.l.b16 %v1258
    %v1394 = vunpack.c.l.b16 %v1259
    %v1395 = vunpack.c.l.b16 %v1260
    %v1396 = vunpack.c.l.b16 %v1261
    %v1397 = vunpack.c.l.b16 %v1262
    %v1398 = vunpack.c.l.b16 %v1263
    %v1399 = vunpack.c.l.b16 %v1264
    %v1400 = vunpack.c.l.b16 %v1265
    %v1401 = vunpack.c.l.b16 %v1266
    %v1402 = vunpack.c.l.b16 %v1267
    %v1403 = vunpack.c.l.b16 %v1268
    %v1404 = vunpack.c.l.b16 %v1269
    %v1405 = vunpack.c.l.b16 %v1270
    %v1406 = vunpack.c.l.b16 %v1271
    %v1407 = vpack.c.b16 %v1344, %v1343
    %v1408 = vpack.c.b16 %v1346, %v1345
    %v1409 = vpack.c.b16 %v1348, %v1347
    %v1410 = vpack.c.b16 %v1350, %v1349
    %v1411 = vpack.c.b16 %v1352, %v1351
    %v1412 = vpack.c.b16 %v1354, %v1353
    %v1413 = vpack.c.b16 %v1356, %v1355
    %v1414 = vpack.c.b16 %v1358, %v1357
    %v1415 = vpack.c.b16 %v1360, %v1359
    %v1416 = vpack.c.b16 %v1362, %v1361
    %v1417 = vpack.c.b16 %v1364, %v1363
    %v1418 = vpack.c.b16 %v1366, %v1365
    %v1419 = vpack.c.b16 %v1368, %v1367
    %v1420 = vpack.c.b16 %v1370, %v1369
    %v1421 = vpack.c.b16 %v1372, %v1371
    %v1422 = vpack.c.b16 %v1374, %v1373
    %v1423 = vpack.c.b16 %v1376, %v1375
    %v1424 = vpack.c.b16 %v1378, %v1377
    %v1425 = vpack.c.b16 %v1380, %v1379
    %v1426 = vpack.c.b16 %v1382, %v1381
    %v1427 = vpack.c.b16 %v1384, %v1383
    %v1428 = vpack.c.b16 %v1386, %v1385
    %v1429 = vpack.c.b16 %v1388, %v1387
    %v1430 = vpack.c.b16 %v1390, %v1389
    %v1431 = vpack.c.b16 %v1392, %v1391
    %v1432 = vpack.c.b16 %v1394, %v1393
    %v1433 = vpack.c.b16 %v1396, %v1395
    %v1434 = vpack.c.b16 %v1398, %v1397
    %v1435 = vpack.c.b16 %v1400, %v1399
    %v1436 = vpack.c.b16 %v1402, %v1401
    %v1437 = vpack.c.b16 %v1404, %v1403
    %v1438 = vpack.c.b16 %v1406, %v1405
    %1471 = vmatprep.subr.bf16.mxu0 0
    %1472 = vmatpush1.bf16.msra.mxu0 %v1407
    %1473 = vmatprep.subr.bf16.mxu0 0
    %1474 = vmatpush1.bf16.msra.mxu0 %v1408
    %1475 = vmatprep.subr.bf16.mxu0 0
    %1476 = vmatpush1.bf16.msra.mxu0 %v1409
    %1477 = vmatprep.subr.bf16.mxu0 0
    %1478 = vmatpush1.bf16.msra.mxu0 %v1410
    %1479 = vmatprep.subr.bf16.mxu0 0
    %1480 = vmatpush1.bf16.msra.mxu0 %v1411
    %1481 = vmatprep.subr.bf16.mxu0 0
    %1482 = vmatpush1.bf16.msra.mxu0 %v1412
    %1483 = vmatprep.subr.bf16.mxu0 0
    %1484 = vmatpush1.bf16.msra.mxu0 %v1413
    %1485 = vmatprep.subr.bf16.mxu0 0
    %1486 = vmatpush1.bf16.msra.mxu0 %v1414
    %1487 = vmatprep.subr.bf16.mxu0 0
    %1488 = vmatpush1.bf16.msra.mxu0 %v1415
    %1489 = vmatprep.subr.bf16.mxu0 0
    %1490 = vmatpush1.bf16.msra.mxu0 %v1416
    %1491 = vmatprep.subr.bf16.mxu0 0
    %1492 = vmatpush1.bf16.msra.mxu0 %v1417
    %1493 = vmatprep.subr.bf16.mxu0 0
    %1494 = vmatpush1.bf16.msra.mxu0 %v1418
    %1495 = vmatprep.subr.bf16.mxu0 0
    %1496 = vmatpush1.bf16.msra.mxu0 %v1419
    %1497 = vmatprep.subr.bf16.mxu0 0
    %1498 = vmatpush1.bf16.msra.mxu0 %v1420
    %1499 = vmatprep.subr.bf16.mxu0 0
    %1500 = vmatpush1.bf16.msra.mxu0 %v1421
    %1501 = vmatprep.subr.bf16.mxu0 0
    %1502 = vmatpush1.bf16.msra.mxu0 %v1422
    %1503 = vmatprep.mubr.bf16.mxu0 %v1205
    %1504 = vmatmul.mubr.bf16.gmra.mrb[0].mxu0 %v1204
    %v1505 = vpop.f32.mrb[0].mxu0
    %v1506 = vadd.f32 %v1277, %v1505
    %v1507 = vpop.f32.mrb[0].mxu0
    %v1508 = vpop.f32.mrb[0].mxu0
    %v1509 = vadd.f32 %v1277, %v1508
    %v1510 = vpop.f32.mrb[0].mxu0
    %1511 = vdwg.mxu0
    %1512 = vmatprep.subr.bf16.mxu0 0
    %1513 = vmatpush1.bf16.msra.mxu0 %v1423
    %1514 = vmatprep.subr.bf16.mxu0 0
    %1515 = vmatpush1.bf16.msra.mxu0 %v1424
    %1516 = vmatprep.subr.bf16.mxu0 0
    %1517 = vmatpush1.bf16.msra.mxu0 %v1425
    %1518 = vmatprep.subr.bf16.mxu0 0
    %1519 = vmatpush1.bf16.msra.mxu0 %v1426
    %1520 = vmatprep.subr.bf16.mxu0 0
    %1521 = vmatpush1.bf16.msra.mxu0 %v1427
    %1522 = vmatprep.subr.bf16.mxu0 0
    %1523 = vmatpush1.bf16.msra.mxu0 %v1428
    %1524 = vmatprep.subr.bf16.mxu0 0
    %1525 = vmatpush1.bf16.msra.mxu0 %v1429
    %1526 = vmatprep.subr.bf16.mxu0 0
    %1527 = vmatpush1.bf16.msra.mxu0 %v1430
    %1528 = vmatprep.subr.bf16.mxu0 0
    %1529 = vmatpush1.bf16.msra.mxu0 %v1431
    %1530 = vmatprep.subr.bf16.mxu0 0
    %1531 = vmatpush1.bf16.msra.mxu0 %v1432
    %1532 = vmatprep.subr.bf16.mxu0 0
    %1533 = vmatpush1.bf16.msra.mxu0 %v1433
    %1534 = vmatprep.subr.bf16.mxu0 0
    %1535 = vmatpush1.bf16.msra.mxu0 %v1434
    %1536 = vmatprep.subr.bf16.mxu0 0
    %1537 = vmatpush1.bf16.msra.mxu0 %v1435
    %1538 = vmatprep.subr.bf16.mxu0 0
    %1539 = vmatpush1.bf16.msra.mxu0 %v1436
    %1540 = vmatprep.subr.bf16.mxu0 0
    %1541 = vmatpush1.bf16.msra.mxu0 %v1437
    %1542 = vmatprep.subr.bf16.mxu0 0
    %1543 = vmatpush1.bf16.msra.mxu0 %v1438
    %1544 = vmatprep.mubr.bf16.mxu0 %v1207
    %1545 = vmatmul.mubr.bf16.gmra.mrb[0].mxu0 %v1206
    %v1546 = vpop.f32.mrb[0].mxu0
    %v1547 = vadd.f32 %v1506, %v1546
    %v1548 = vpop.f32.mrb[0].mxu0
    %v1549 = vpop.f32.mrb[0].mxu0
    %v1550 = vadd.f32 %v1509, %v1549
    %v1551 = vpop.f32.mrb[0].mxu0
    %1552 = vdwg.mxu0
    %v1553 = vtanh.pop %v1547
    %v1554 = vtanh.pop %v1550
    %v1555 = vmul.f32 %v1553, 2.0
    %v1556 = vmul.f32 %v1554, 2.0
    %v1557 = vpack.c.bf16 %v1556, %v1555
    %v1559 = vunpack.c.l.b16 %v1557
    %v1560 = vunpack.c.h.b16 %v1557
    %v1561 = vpack.c.b16 %v1559, %v1559
    %v1562 = vpack.c.b16 %v1560, %v1560
    %1565 = vst [vmem:[#allocation10] sm:$0xf] %v1561
    %1566 = vst [vmem:[#allocation10 + $0x4] sm:$0xf] %v1562
    // Predicated region
    $region46: #{tpu_custom_call.1} parent=1 // pred_check
      _
    $region47: #{tpu_custom_call.1} parent=1 // pred_check_branch
      %1568 = sbr.rel (0) target = $region49
    $region48: #{tpu_custom_call.1} parent=1 // pred_region
      %s1570 = ssub.s32 128, 128
      %1571 = vsyncadd [#allocation4], %s1570
      %s1572 = sshll.u32 [#allocation10], 4
      %s1573 = int_to_ptr.vmem [resolvable:$true] %s1572
      %1578 = dma.vmem_to_hbm [thread:$0]  %s1573, 128, %s7, [#allocation4], 64, 64, 4
    $region49: #{tpu_custom_call.1} parent=1 // pred_fallthru
      _
    // Predicated region
    $region50: #{tpu_custom_call.1} parent=1 // pred_check
      _
    $region51: #{tpu_custom_call.1} parent=1 // pred_check_branch
      %1580 = sbr.rel (0) target = $region53
    $region52: #{tpu_custom_call.1} parent=1 // pred_region
      %1581 = dma.done [#allocation4], 128
    $region53: #{tpu_custom_call.1} parent=1 // pred_fallthru
      _
    %1582 = vsyncpa [#allocation3], 1
    %1583 = vsyncpa [#allocation6], 1
    %1584 = vsyncpa [#allocation9], 1
    %1585 = vsyncpa [#allocation4], 1

</llo_original>
